<compile_context>
chip_gen: v6e
topology: v6e:2x2x1
jax: 0.10.0
libtpu: 0.0.40
codegen_flags: <defaults>
</compile_context>

<pallas_src>
import functools

import jax
import jax.numpy as jnp
from jax import lax
from jax.experimental import pallas as pl
from jax.experimental.pallas import tpu as pltpu


def _shifts(K, dil, Wp):
    # Flat lane offset of dilated tap (kh, kw) relative to output position.
    return [dil * kh * Wp + dil * kw for kh in range(K) for kw in range(K)]


def _conv_rows(w_ref, x_ref, *, CO_pad, Lw, shifts):
    """Dilated conv as ONE stacked MXU matmul + KK shifted adds of the small
    (CO_pad, Lw) result slabs (shifts act on the CO_pad-row result, not on the
    C-row input)."""
    # w_ref: (KK*CO_pad, C), x_ref: (C, Lx)
    p = jnp.dot(w_ref[...], x_ref[...],
                preferred_element_type=jnp.float32)            # (KK*CO_pad, Lx)
    sig = jnp.zeros((CO_pad, Lw), jnp.float32)
    for k, s in enumerate(shifts):
        sig = sig + p[k * CO_pad:(k + 1) * CO_pad, s:s + Lw]
    return sig                                                  # (CO_pad, Lw)


def _stats_kernel(xf_ref, w_ref, mask_ref, stats_ref, *,
                  K, CO, CO_pad, Wp, Lw, dil, cnt, total_cnt, eps):
    """Pass 1: per-output-channel BatchNorm batch statistics (mean, rstd)."""
    b = pl.program_id(0)

    @pl.when(b == 0)
    def _init():
        stats_ref[...] = jnp.zeros_like(stats_ref)

    shifts = _shifts(K, dil, Wp)
    sig = _conv_rows(w_ref, xf_ref, CO_pad=CO_pad, Lw=Lw, shifts=shifts)[:CO]

    mask = mask_ref[...]                                        # (1, Lw) valid cols
    tile_mean = jnp.sum(sig * mask, axis=1, keepdims=True) * (1.0 / cnt)   # (CO,1)
    dev = (sig - tile_mean) * mask
    tile_m2 = jnp.sum(dev * dev, axis=1, keepdims=True)                    # (CO,1)

    # Chan's parallel-variance combine (equal-size tiles; this is tile #b).
    run_mean = stats_ref[:, 0:1]
    run_m2 = stats_ref[:, 1:2]
    fb = b.astype(jnp.float32)
    delta = tile_mean - run_mean
    stats_ref[:, 0:1] = run_mean + delta * (1.0 / (fb + 1.0))
    stats_ref[:, 1:2] = run_m2 + tile_m2 + delta * delta * (cnt * fb / (fb + 1.0))

    @pl.when(b == pl.num_programs(0) - 1)
    def _finalize():
        var = stats_ref[:, 1:2] * (1.0 / total_cnt)             # biased variance
        stats_ref[:, 1:2] = lax.rsqrt(var + eps)


def _apply_kernel(xf_ref, w_ref, stats_ref, o_ref, *,
                  K, CO, CO_pad, group, Wp, Lw, dil):
    """Pass 2: normalize + channel softmax + adaptive dilated weighted sum."""
    KK = K * K
    C = xf_ref.shape[0]
    cg = C // group
    shifts = _shifts(K, dil, Wp)

    sig = _conv_rows(w_ref, xf_ref, CO_pad=CO_pad, Lw=Lw, shifts=shifts)[:CO]

    mean = stats_ref[:, 0:1]                                    # (CO, 1)
    rstd = stats_ref[:, 1:2]                                    # (CO, 1)
    sig = (sig - mean) * rstd

    # Softmax over the CO (sublane) axis.
    m = jnp.max(sig, axis=0, keepdims=True)                     # (1, Lw)
    e = jnp.exp(sig - m)
    den = jnp.sum(e, axis=0, keepdims=True)                     # (1, Lw)
    sm = e * pl.reciprocal(den, approx=False)                   # (CO, Lw)

    # Weighted dilated-neighborhood sum, one k at a time (no KK-expanded temp).
    accs = [jnp.zeros((cg, Lw), jnp.float32) for _ in range(group)]
    for k, s in enumerate(shifts):
        xs = xf_ref[:, s:s + Lw]                                # (C, Lw) unfold view
        for g in range(group):
            row = sm[g * KK + k:g * KK + k + 1, :]              # (1, Lw) broadcast
            xg = xs if group == 1 else xs[g * cg:(g + 1) * cg, :]
            accs[g] = accs[g] + xg * row
    out = accs[0] if group == 1 else jnp.concatenate(accs, axis=0)
    o_ref[...] = out.astype(o_ref.dtype)


def downsample_improve1(x, conv_weight, *, kernel_size=3, group=1, eps=1e-5):
    """x: (N, C, H, W) f32; conv_weight: (group*K*K, C, K, K) f32 -> (N, C, Ho, Wo)."""
    N, C, H, W = x.shape
    K = kernel_size
    KK = K * K
    CO = group * KK
    CO_pad = ((CO + 7) // 8) * 8          # sublane-aligned per-k weight blocks
    pad, dil = 3, 3                       # fixed by the module
    Ho = H + 2 * pad - dil * (K - 1)
    Wo = W + 2 * pad - dil * (K - 1)
    Hp, Wp = H + 2 * pad, W + 2 * pad
    Lw = Ho * Wp                          # flat working span (row stride = Wp)
    Lx = Hp * Wp + dil * (K - 1)          # flat padded input length (covers max shift)
    cnt = Ho * Wo                         # valid positions per batch element

    x = x.astype(jnp.float32)
    # Zero-pad spatially and flatten (H, W) into lanes.  No 9x im2col ever
    # touches HBM: the kernels build the K*K shifted views in VMEM.
    xpad = jnp.pad(x, ((0, 0), (0, 0), (pad, pad), (pad, pad)))
    xflat = jnp.pad(xpad.reshape(N, C, Hp * Wp),
                    ((0, 0), (0, 0), (0, Lx - Hp * Wp)))

    # Conv weight (CO, C, K, K) -> (KK*CO_pad, C): row = k*CO_pad + o with
    # k = kh*K + kw; rows CO..CO_pad-1 of each k-block are zero (alignment).
    w = conv_weight.astype(jnp.float32).reshape(CO, C, KK)
    w = jnp.transpose(w, (2, 0, 1))                     # (KK, CO, C)
    w = jnp.pad(w, ((0, 0), (0, CO_pad - CO), (0, 0)))  # (KK, CO_pad, C)
    wmat = w.reshape(KK * CO_pad, C)

    # Valid-column mask for the flat layout (lane l valid iff l % Wp < Wo).
    mask = ((jnp.arange(Lw) % Wp) < Wo).astype(jnp.float32).reshape(1, Lw)

    # ---- Pass 1: BN batch statistics, accumulated across the batch grid.
    stats_kernel = functools.partial(
        _stats_kernel, K=K, CO=CO, CO_pad=CO_pad, Wp=Wp, Lw=Lw, dil=dil,
        cnt=float(cnt), total_cnt=float(N * cnt), eps=eps)
    stats = pl.pallas_call(
        stats_kernel,
        out_shape=jax.ShapeDtypeStruct((CO, 2), jnp.float32),
        grid=(N,),
        in_specs=[pl.BlockSpec((None, C, Lx), lambda b: (b, 0, 0)),
                  pl.BlockSpec((KK * CO_pad, C), lambda b: (0, 0)),
                  pl.BlockSpec((1, Lw), lambda b: (0, 0))],
        out_specs=pl.BlockSpec((CO, 2), lambda b: (0, 0)),
        compiler_params=pltpu.CompilerParams(
            dimension_semantics=("arbitrary",)),
    )(xflat, wmat, mask)

    # ---- Pass 2: normalize + softmax + weighted neighborhood sum.
    apply_kernel = functools.partial(
        _apply_kernel, K=K, CO=CO, CO_pad=CO_pad, group=group,
        Wp=Wp, Lw=Lw, dil=dil)
    outflat = pl.pallas_call(
        apply_kernel,
        out_shape=jax.ShapeDtypeStruct((N, C, Lw), jnp.float32),
        grid=(N,),
        in_specs=[pl.BlockSpec((None, C, Lx), lambda b: (b, 0, 0)),
                  pl.BlockSpec((KK * CO_pad, C), lambda b: (0, 0)),
                  pl.BlockSpec((CO, 2), lambda b: (0, 0))],
        out_specs=pl.BlockSpec((None, C, Lw), lambda b: (b, 0, 0)),
        compiler_params=pltpu.CompilerParams(
            dimension_semantics=("parallel",)),
    )(xflat, wmat, stats)

    # Output is already NCHW-ordered; just crop the Wp-stride pad columns.
    return outflat.reshape(N, C, Ho, Wp)[:, :, :, :Wo]


def _reference(x, conv_weight, *, kernel_size=3, group=1, eps=1e-5):
    """Pure-JAX mirror of the PyTorch forward (training-mode BN)."""
    N, C, H, W = x.shape
    K = kernel_size
    KK = K * K
    pad, dil = 3, 3
    sigma = lax.conv_general_dilated(
        x, conv_weight, window_strides=(1, 1),
        padding=((pad, pad), (pad, pad)), rhs_dilation=(dil, dil),
        dimension_numbers=('NCHW', 'OIHW', 'NCHW'))
    mean = jnp.mean(sigma, axis=(0, 2, 3), keepdims=True)
    var = jnp.mean((sigma - mean) ** 2, axis=(0, 2, 3), keepdims=True)
    sigma = (sigma - mean) / jnp.sqrt(var + eps)
    sigma = jax.nn.softmax(sigma, axis=1)
    n, c, h, wd = sigma.shape
    sigma = sigma.reshape(n, 1, c, h * wd)

    xpad = jnp.pad(x, ((0, 0), (0, 0), (pad, pad), (pad, pad)))
    cols = []
    for ci in range(C):                      # torch unfold order: index = ci*KK + k
        for kh in range(K):
            for kw in range(K):
                cols.append(
                    xpad[:, ci, dil * kh:dil * kh + h, dil * kw:dil * kw + wd]
                    .reshape(N, h * wd))
    xu = jnp.stack(cols, axis=1).reshape(N, C, KK, h * wd)
    xg = jnp.transpose(xu, (1, 0, 2, 3)).reshape(group, C // group, N, KK, h * wd)
    xg = jnp.transpose(xg, (2, 0, 1, 3, 4))                      # (N, g, C/g, KK, L)
    sg = jnp.transpose(sigma, (2, 0, 1, 3)).reshape(c // KK, KK, N, 1, h * wd)
    sg = jnp.transpose(sg, (2, 0, 3, 1, 4))                      # (N, g, 1, KK, L)
    return jnp.sum(xg * sg, axis=3).reshape(N, C, h, wd)


if __name__ == "__main__":
    key = jax.random.PRNGKey(0)
    kx, kw = jax.random.split(key)

    N, C, H, W = 2, 4, 16, 16
    K, group = 3, 1
    CO = group * K * K

    x = jax.random.normal(kx, (N, C, H, W), dtype=jnp.float32)
    # Deterministic kaiming_normal_(mode='fan_out', nonlinearity='relu'):
    # fan_out = CO * K * K, std = sqrt(2 / fan_out)
    std = (2.0 / (CO * K * K)) ** 0.5
    conv_weight = std * jax.random.normal(kw, (CO, C, K, K), dtype=jnp.float32)

    out = downsample_improve1(x, conv_weight, kernel_size=K, group=group)
    out = jax.block_until_ready(out)

    ref = _reference(x, conv_weight, kernel_size=K, group=group)
    assert out.shape == (N, C, H, W), out.shape
    max_err = float(jnp.max(jnp.abs(out - ref)))
    assert jnp.allclose(out, ref, atol=1e-4, rtol=1e-4), f"max_err={max_err}"

    print("KERNEL_OK")
</pallas_src>

<mosaic_0001>
module attributes {stable_mosaic.version = 11 : i64} {
  func.func @_stats_kernel(%arg0: i32, %arg1: memref<1x4x490xf32, #tpu.memory_space<vmem>>, %arg2: memref<144x4xf32, #tpu.memory_space<vmem>>, %arg3: memref<1x352xf32, #tpu.memory_space<vmem>>, %arg4: memref<9x2xf32, #tpu.memory_space<vmem>>) attributes {dimension_semantics = [#tpu.dimension_semantics<arbitrary>], iteration_bounds = array<i64: 2>, scalar_prefetch = 0 : i64, scratch_operands = 0 : i64, tpu.core_type = #tpu.core_type<tc>, window_params = [{transform_indices = @transform_0, window_bounds = array<i64: 1, 4, 490>}, {pipeline_mode = #tpu.pipeline_mode<synchronous>, transform_indices = @transform_1, window_bounds = array<i64: 144, 4>}, {pipeline_mode = #tpu.pipeline_mode<synchronous>, transform_indices = @transform_2, window_bounds = array<i64: 1, 352>}, {pipeline_mode = #tpu.pipeline_mode<synchronous>, transform_indices = @transform_3, window_bounds = array<i64: 9, 2>}]} {
    %c0_i32 = arith.constant 0 : i32
    %0 = arith.cmpi eq, %arg0, %c0_i32 : i32
    %1 = arith.extui %0 : i1 to i32
    %c0_i32_0 = arith.constant 0 : i32
    %2 = arith.cmpi ne, %1, %c0_i32_0 : i32
    scf.if %2 {
      %cst_23 = arith.constant 0.000000e+00 : f32
      %63 = vector.broadcast %cst_23 : f32 to vector<9x2xf32>
      %c0_24 = arith.constant 0 : index
      %c0_25 = arith.constant 0 : index
      %64 = vector.load %arg4[%c0_24, %c0_25] : memref<9x2xf32, #tpu.memory_space<vmem>>, vector<9x2xf32>
      tpu.vector_store %arg4[%c0_24, %c0_25], %63 {strides = array<i32>} : memref<9x2xf32, #tpu.memory_space<vmem>>, vector<9x2xf32>,
    } else {
    }
    %c0 = arith.constant 0 : index
    %c0_1 = arith.constant 0 : index
    %3 = vector.load %arg2[%c0, %c0_1] : memref<144x4xf32, #tpu.memory_space<vmem>>, vector<144x4xf32>
    %c0_2 = arith.constant 0 : index
    %c0_3 = arith.constant 0 : index
    %c0_4 = arith.constant 0 : index
    %4 = vector.load %arg1[%c0_2, %c0_3, %c0_4] : memref<1x4x490xf32, #tpu.memory_space<vmem>>, vector<1x4x490xf32>
    %5 = vector.shape_cast %4 : vector<1x4x490xf32> to vector<4x490xf32>
    %cst = arith.constant dense<0.000000e+00> : vector<144x490xf32>
    %6 = tpu.matmul %3, %5, %cst {dimension_numbers = #tpu.dot_dimension_numbers<[1], [0], [0], [1], [0, 0, 1, 1], [], []>} : vector<144x4xf32>, vector<4x490xf32>, vector<144x490xf32> -> vector<144x490xf32>
    %cst_5 = arith.constant 0.000000e+00 : f32
    %7 = vector.broadcast %cst_5 : f32 to vector<16x352xf32>
    %8 = vector.extract_strided_slice %6 {offsets = [0, 0], sizes = [16, 352], strides = [1, 1]} : vector<144x490xf32> to vector<16x352xf32>
    %9 = arith.addf %7, %8 : vector<16x352xf32>
    %10 = vector.extract_strided_slice %6 {offsets = [16, 3], sizes = [16, 352], strides = [1, 1]} : vector<144x490xf32> to vector<16x352xf32>
    %11 = arith.addf %9, %10 : vector<16x352xf32>
    %12 = vector.extract_strided_slice %6 {offsets = [32, 6], sizes = [16, 352], strides = [1, 1]} : vector<144x490xf32> to vector<16x352xf32>
    %13 = arith.addf %11, %12 : vector<16x352xf32>
    %14 = vector.extract_strided_slice %6 {offsets = [48, 66], sizes = [16, 352], strides = [1, 1]} : vector<144x490xf32> to vector<16x352xf32>
    %15 = arith.addf %13, %14 : vector<16x352xf32>
    %16 = vector.extract_strided_slice %6 {offsets = [64, 69], sizes = [16, 352], strides = [1, 1]} : vector<144x490xf32> to vector<16x352xf32>
    %17 = arith.addf %15, %16 : vector<16x352xf32>
    %18 = vector.extract_strided_slice %6 {offsets = [80, 72], sizes = [16, 352], strides = [1, 1]} : vector<144x490xf32> to vector<16x352xf32>
    %19 = arith.addf %17, %18 : vector<16x352xf32>
    %20 = vector.extract_strided_slice %6 {offsets = [96, 132], sizes = [16, 352], strides = [1, 1]} : vector<144x490xf32> to vector<16x352xf32>
    %21 = arith.addf %19, %20 : vector<16x352xf32>
    %22 = vector.extract_strided_slice %6 {offsets = [112, 135], sizes = [16, 352], strides = [1, 1]} : vector<144x490xf32> to vector<16x352xf32>
    %23 = arith.addf %21, %22 : vector<16x352xf32>
    %24 = vector.extract_strided_slice %6 {offsets = [128, 138], sizes = [16, 352], strides = [1, 1]} : vector<144x490xf32> to vector<16x352xf32>
    %25 = arith.addf %23, %24 : vector<16x352xf32>
    %26 = vector.extract_strided_slice %25 {offsets = [0, 0], sizes = [9, 352], strides = [1, 1]} : vector<16x352xf32> to vector<9x352xf32>
    %c0_6 = arith.constant 0 : index
    %c0_7 = arith.constant 0 : index
    %27 = vector.load %arg3[%c0_6, %c0_7] : memref<1x352xf32, #tpu.memory_space<vmem>>, vector<1x352xf32>
    %28 = vector.broadcast %27 : vector<1x352xf32> to vector<9x352xf32>
    %29 = arith.mulf %26, %28 : vector<9x352xf32>
    %cst_8 = arith.constant dense<0.000000e+00> : vector<9xf32>
    %30 = vector.multi_reduction <add>, %29, %cst_8 [1] : vector<9x352xf32> to vector<9xf32>
    %31 = vector.shape_cast %30 : vector<9xf32> to vector<9x1xf32>
    %cst_9 = arith.constant 3.906250e-03 : f32
    %32 = vector.broadcast %cst_9 : f32 to vector<9x1xf32>
    %33 = arith.mulf %31, %32 : vector<9x1xf32>
    %34 = vector.broadcast %33 : vector<9x1xf32> to vector<9x352xf32>
    %35 = arith.subf %26, %34 : vector<9x352xf32>
    %36 = vector.broadcast %27 : vector<1x352xf32> to vector<9x352xf32>
    %37 = arith.mulf %35, %36 : vector<9x352xf32>
    %38 = arith.mulf %37, %37 : vector<9x352xf32>
    %cst_10 = arith.constant dense<0.000000e+00> : vector<9xf32>
    %39 = vector.multi_reduction <add>, %38, %cst_10 [1] : vector<9x352xf32> to vector<9xf32>
    %40 = vector.shape_cast %39 : vector<9xf32> to vector<9x1xf32>
    %c0_11 = arith.constant 0 : index
    %c0_12 = arith.constant 0 : index
    %41 = vector.load %arg4[%c0_11, %c0_12] : memref<9x2xf32, #tpu.memory_space<vmem>>, vector<9x1xf32>
    %c0_13 = arith.constant 0 : index
    %c1 = arith.constant 1 : index
    %42 = vector.load %arg4[%c0_13, %c1] : memref<9x2xf32, #tpu.memory_space<vmem>>, vector<9x1xf32>
    %43 = arith.sitofp %arg0 : i32 to f32
    %44 = arith.subf %33, %41 : vector<9x1xf32>
    %cst_14 = arith.constant 1.000000e+00 : f32
    %45 = arith.addf %43, %cst_14 : f32
    %cst_15 = arith.constant 1.000000e+00 : f32
    %46 = arith.divf %cst_15, %45 : f32
    %47 = vector.broadcast %46 : f32 to vector<9x1xf32>
    %48 = arith.mulf %44, %47 : vector<9x1xf32>
    %49 = arith.addf %41, %48 : vector<9x1xf32>
    %c0_16 = arith.constant 0 : index
    %c0_17 = arith.constant 0 : index
    %50 = vector.load %arg4[%c0_16, %c0_17] : memref<9x2xf32, #tpu.memory_space<vmem>>, vector<9x1xf32>
    tpu.vector_store %arg4[%c0_16, %c0_17], %49 {strides = array<i32>} : memref<9x2xf32, #tpu.memory_space<vmem>>, vector<9x1xf32>,
    %51 = arith.addf %42, %40 : vector<9x1xf32>
    %52 = arith.mulf %44, %44 : vector<9x1xf32>
    %cst_18 = arith.constant 2.560000e+02 : f32
    %53 = arith.mulf %cst_18, %43 : f32
    %cst_19 = arith.constant 1.000000e+00 : f32
    %54 = arith.addf %43, %cst_19 : f32
    %55 = arith.divf %53, %54 : f32
    %56 = vector.broadcast %55 : f32 to vector<9x1xf32>
    %57 = arith.mulf %52, %56 : vector<9x1xf32>
    %58 = arith.addf %51, %57 : vector<9x1xf32>
    %c0_20 = arith.constant 0 : index
    %c1_21 = arith.constant 1 : index
    %59 = vector.load %arg4[%c0_20, %c1_21] : memref<9x2xf32, #tpu.memory_space<vmem>>, vector<9x1xf32>
    tpu.vector_store %arg4[%c0_20, %c1_21], %58 {strides = array<i32>} : memref<9x2xf32, #tpu.memory_space<vmem>>, vector<9x1xf32>,
    %c1_i32 = arith.constant 1 : i32
    %60 = arith.cmpi eq, %arg0, %c1_i32 : i32
    %61 = arith.extui %60 : i1 to i32
    %c0_i32_22 = arith.constant 0 : i32
    %62 = arith.cmpi ne, %61, %c0_i32_22 : i32
    scf.if %62 {
      %c0_23 = arith.constant 0 : index
      %c1_24 = arith.constant 1 : index
      %63 = vector.load %arg4[%c0_23, %c1_24] : memref<9x2xf32, #tpu.memory_space<vmem>>, vector<9x1xf32>
      %cst_25 = arith.constant 0.001953125 : f32
      %64 = vector.broadcast %cst_25 : f32 to vector<9x1xf32>
      %65 = arith.mulf %63, %64 : vector<9x1xf32>
      %cst_26 = arith.constant 9.99999974E-6 : f32
      %66 = vector.broadcast %cst_26 : f32 to vector<9x1xf32>
      %67 = arith.addf %65, %66 : vector<9x1xf32>
      %68 = math.rsqrt %67 : vector<9x1xf32>
      %c0_27 = arith.constant 0 : index
      %c1_28 = arith.constant 1 : index
      %69 = vector.load %arg4[%c0_27, %c1_28] : memref<9x2xf32, #tpu.memory_space<vmem>>, vector<9x1xf32>
      tpu.vector_store %arg4[%c0_27, %c1_28], %68 {strides = array<i32>} : memref<9x2xf32, #tpu.memory_space<vmem>>, vector<9x1xf32>,
    } else {
    }
    return
  }
  func.func @transform_0(%arg0: i32) -> (i32, i32, i32) {
    %c0_i32 = arith.constant 0 : i32
    %c0_i32_0 = arith.constant 0 : i32
    %c0_i32_1 = arith.constant 0 : i32
    return %arg0, %c0_i32, %c0_i32_0 : i32, i32, i32
  }
  func.func @transform_1(%arg0: i32) -> (i32, i32) {
    %c0_i32 = arith.constant 0 : i32
    %c0_i32_0 = arith.constant 0 : i32
    %c0_i32_1 = arith.constant 0 : i32
    return %c0_i32, %c0_i32_0 : i32, i32
  }
  func.func @transform_2(%arg0: i32) -> (i32, i32) {
    %c0_i32 = arith.constant 0 : i32
    %c0_i32_0 = arith.constant 0 : i32
    %c0_i32_1 = arith.constant 0 : i32
    return %c0_i32, %c0_i32_0 : i32, i32
  }
  func.func @transform_3(%arg0: i32) -> (i32, i32) {
    %c0_i32 = arith.constant 0 : i32
    %c0_i32_0 = arith.constant 0 : i32
    %c0_i32_1 = arith.constant 0 : i32
    return %c0_i32, %c0_i32_0 : i32, i32
  }
}

</mosaic_0001>

<llo_original>
// kernel: tpu_custom_call.1
$region0: #{tpu_custom_call.1}
  #allocation0 [shape = 'u32[]', space=smem, size = 0x4, offset = 0x4, fixed_abs, tag = 'smem constant byte address 0x4 - core index']
  #allocation1 [shape = 'u32[144,128]{1,0:T(1,128)}', space=vmem, size = 0x12000, scoped, tag = 'internal scratch']
  %s0 = inlined_call_operand.vmem [shape: f32[2,4,490], index: 0, kind: input, shape index: {}]
  %s1 = inlined_call_operand.vmem [shape: f32[144,4], index: 1, kind: input, shape index: {}]
  %s2 = inlined_call_operand.vmem [shape: f32[1,352], index: 2, kind: input, shape index: {}]
  %s3 = inlined_call_operand.vmem [shape: f32[9,2], index: 3, kind: output, shape index: {}]
  %s4 = sld [smem:[#allocation0]]
  $region53: #{tpu_custom_call.1} parent=0
    _
  %s6 = ssub.s32 1, %s4
  %s7 = scalar_select 0, %s6, %s4
  loop: start=0, step=1, limit=4
  $region2: #{tpu_custom_call.1} parent=0 // loop_pre_header
    _
  $region3: #{tpu_custom_call.1} parent=0 // loop_header
    %s9 = sphi 0, %s13
    %p10 = scmp.ge.s32.totalorder %s9, 4
    %s19 = sphi 0, %s21
    %s22 = sphi 0, %s19
    %s23 = sphi 0, %s22
    %s39 = sphi 0, %s23
    %s43 = sphi 0, %s43
    %s45 = sphi 0, %s43
    %s46 = sphi 0, %s45
    %s60 = sphi 0, %s46
    %s64 = sphi 0, %s64
    %s66 = sphi 0, %s64
    %s67 = sphi 0, %s66
    %s81 = sphi 0, %s67
    %s85 = sphi 0, %s85
    %s87 = sphi 0, %s85
    %s88 = sphi 0, %s87
    %s102 = sphi 0, %s88
  $region4: #{tpu_custom_call.1} parent=0 // loop_header_branch
    %12 = sbr.rel (%p10) target = $region8
  $region5: #{tpu_custom_call.1} parent=0 // loop_body
    %s14 = ssub.s32 %s9, 1
    %s15 = ssub.s32 %s9, 2
    %s16 = sadd.s32 %s9, 1
    %s17 = ssub.s32 %s9, %s16
    %p18 = scmp.eq.s32.totalorder %s17, 0
    %s20 = sadd.s32 %s19, 1
    %s21 = scalar_select %p18, %s19, %s20
    %p24 = pneg %p18
    %p25 = scmp.eq.s32.totalorder %s9, 1
    %p26 = por %p24, %p25
    %p27 = scmp.ne.s32.totalorder %s19, %s22
    %p28 = scmp.eq.s32.totalorder %s9, 0
    %p29 = por %p27, %p28
    %p30 = scmp.ne.s32.totalorder %s19, %s22
    %p31 = scmp.eq.s32.totalorder %s14, 1
    %p32 = por %p30, %p31
    %p33 = scmp.ne.s32.totalorder %s22, %s23
    %p34 = scmp.eq.s32.totalorder %s14, 0
    %p35 = por %p33, %p34
    %p36 = scmp.ne.s32.totalorder %s22, %s23
    %p37 = scmp.eq.s32.totalorder %s15, 1
    %p38 = por %p36, %p37
    %p40 = scmp.ne.s32.totalorder %s23, %s39
    %p41 = scmp.eq.s32.totalorder %s15, 0
    %p42 = por %p40, %p41
    %s44 = sadd.s32 %s43, 1
    %p47 = scmp.eq.s32.totalorder %s9, 1
    %p48 = scmp.ne.s32.totalorder %s43, %s45
    %p49 = scmp.eq.s32.totalorder %s9, 0
    %p50 = por %p48, %p49
    %p51 = scmp.ne.s32.totalorder %s43, %s45
    %p52 = scmp.eq.s32.totalorder %s14, 1
    %p53 = por %p51, %p52
    %p54 = scmp.ne.s32.totalorder %s45, %s46
    %p55 = scmp.eq.s32.totalorder %s14, 0
    %p56 = por %p54, %p55
    %p57 = scmp.ne.s32.totalorder %s45, %s46
    %p58 = scmp.eq.s32.totalorder %s15, 1
    %p59 = por %p57, %p58
    %p61 = scmp.ne.s32.totalorder %s46, %s60
    %p62 = scmp.eq.s32.totalorder %s15, 0
    %p63 = por %p61, %p62
    %s65 = sadd.s32 %s64, 1
    %p68 = scmp.eq.s32.totalorder %s9, 1
    %p69 = scmp.ne.s32.totalorder %s64, %s66
    %p70 = scmp.eq.s32.totalorder %s9, 0
    %p71 = por %p69, %p70
    %p72 = scmp.ne.s32.totalorder %s64, %s66
    %p73 = scmp.eq.s32.totalorder %s14, 1
    %p74 = por %p72, %p73
    %p75 = scmp.ne.s32.totalorder %s66, %s67
    %p76 = scmp.eq.s32.totalorder %s14, 0
    %p77 = por %p75, %p76
    %p78 = scmp.ne.s32.totalorder %s66, %s67
    %p79 = scmp.eq.s32.totalorder %s15, 1
    %p80 = por %p78, %p79
    %p82 = scmp.ne.s32.totalorder %s67, %s81
    %p83 = scmp.eq.s32.totalorder %s15, 0
    %p84 = por %p82, %p83
    %s86 = sadd.s32 %s85, 1
    %p89 = scmp.eq.s32.totalorder %s9, 1
    %p90 = scmp.ne.s32.totalorder %s85, %s87
    %p91 = scmp.eq.s32.totalorder %s9, 0
    %p92 = por %p90, %p91
    %p93 = scmp.ne.s32.totalorder %s85, %s87
    %p94 = scmp.eq.s32.totalorder %s14, 1
    %p95 = por %p93, %p94
    %p96 = scmp.ne.s32.totalorder %s87, %s88
    %p97 = scmp.eq.s32.totalorder %s14, 0
    %p98 = por %p96, %p97
    %p99 = scmp.ne.s32.totalorder %s87, %s88
    %p100 = scmp.eq.s32.totalorder %s15, 1
    %p101 = por %p99, %p100
    %p103 = scmp.ne.s32.totalorder %s88, %s102
    %p104 = scmp.eq.s32.totalorder %s15, 0
    %p105 = por %p103, %p104
    %p106 = scmp.le.s32.totalorder 1, %s9
    %p107 = scmp.lt.s32.totalorder %s9, 3
    %p108 = pnand %p106, %p107
    %p109 = pneg %p108
    // Predicated region
    $region9: #{tpu_custom_call.1} parent=5 // pred_check
      _
    $region10: #{tpu_custom_call.1} parent=5 // pred_check_branch
      %111 = sbr.rel (%p108) target = $region12
    $region11: #{tpu_custom_call.1} parent=5 // pred_region
      %s112 = ssub.s32 %s9, 1
      // Predicated region
      $region13: #{tpu_custom_call.1} parent=11 // pred_check
        %p113 = pneg %p56
      $region14: #{tpu_custom_call.1} parent=11 // pred_check_branch
        %115 = sbr.rel (%p113) target = $region16
      $region15: #{tpu_custom_call.1} parent=11 // pred_region
        _
      $region16: #{tpu_custom_call.1} parent=11 // pred_fallthru
        _
      // Predicated region
      $region17: #{tpu_custom_call.1} parent=11 // pred_check
        %p116 = pneg %p77
      $region18: #{tpu_custom_call.1} parent=11 // pred_check_branch
        %118 = sbr.rel (%p116) target = $region20
      $region19: #{tpu_custom_call.1} parent=11 // pred_region
        _
      $region20: #{tpu_custom_call.1} parent=11 // pred_fallthru
        _
    $region12: #{tpu_custom_call.1} parent=5 // pred_fallthru
      _
    %p119 = scmp.lt.s32.totalorder %s9, 2
    // Predicated region
    $region21: #{tpu_custom_call.1} parent=5 // pred_check
      %p120 = pneg %p119
    $region22: #{tpu_custom_call.1} parent=5 // pred_check_branch
      %122 = sbr.rel (%p120) target = $region24
    $region23: #{tpu_custom_call.1} parent=5 // pred_region
      // Predicated region
      $region25: #{tpu_custom_call.1} parent=23 // pred_check
        %p123 = pneg %p29
      $region26: #{tpu_custom_call.1} parent=23 // pred_check_branch
        %125 = sbr.rel (%p123) target = $region28
      $region27: #{tpu_custom_call.1} parent=23 // pred_region
        %p126 = scmp.lt.s32.totalorder %s9, 1
        %s127 = scalar_select %p126, %s9, 1
        %s128 = smul.addr %s127, 4
        %s129 = smul.addr %s128, 4
        %s130 = scalar_lea.vmem %s0, %s129
      $region28: #{tpu_custom_call.1} parent=23 // pred_fallthru
        _
    $region24: #{tpu_custom_call.1} parent=5 // pred_fallthru
      _
    %p131 = scmp.le.s32.totalorder 1, %s9
    %p132 = scmp.lt.s32.totalorder %s9, 3
    %p133 = pnand %p131, %p132
    %p134 = pneg %p133
    // Predicated region
    $region29: #{tpu_custom_call.1} parent=5 // pred_check
      _
    $region30: #{tpu_custom_call.1} parent=5 // pred_check_branch
      %136 = sbr.rel (%p133) target = $region32
    $region31: #{tpu_custom_call.1} parent=5 // pred_region
      %s137 = ssub.s32 %s9, 1
      %p138 = scmp.lt.s32.totalorder %s14, 1
      %s139 = scalar_select %p138, %s14, 1
      %s140 = smul.addr %s139, 4
      %s141 = smul.addr %s140, 4
      %s142 = scalar_lea.vmem %s0, %s141
      %p143 = pneg %p35
      %p144 = pneg %p32
      %p145 = pneg %p56
      %p146 = pneg %p53
      %p147 = pneg %p77
      %p148 = pneg %p74
      %p149 = pneg %p98
      %p150 = pneg %p95
      %p151 = scmp.lt.s32.totalorder %s14, 1
      %s152 = scalar_select %p151, %s14, 1
      %s153 = smul.addr %s152, 4
      %s154 = smul.addr %s153, 4
      %s155 = scalar_lea.vmem %s0, %s154
      %p156 = scmp.eq.s32.totalorder %s14, 0
      // Predicated region
      $region33: #{tpu_custom_call.1} parent=31 // pred_check
        %p157 = pneg %p156
      $region34: #{tpu_custom_call.1} parent=31 // pred_check_branch
        %159 = sbr.rel (%p157) target = $region36
      $region35: #{tpu_custom_call.1} parent=31 // pred_region
        %vm160 = vcmask 15360
        %161 = vst.msk [vmem:[%s3] sm:$0xff] %vm160, 0.0
        %vm162 = vcmask 8192
        %163 = vst.msk [vmem:[%s3 + $0x8] sm:$0x1] %vm162, 0.0
      $region36: #{tpu_custom_call.1} parent=31 // pred_fallthru
        _
      %v164 = vld [vmem:[%s1] sm:$0xff]
      %v165 = vld [vmem:[%s1 + $0x8] sm:$0xff]
      %v166 = vld [vmem:[%s1 + $0x10] sm:$0xff]
      %v167 = vld [vmem:[%s1 + $0x18] sm:$0xff]
      %v168 = vld [vmem:[%s1 + $0x20] sm:$0xff]
      %v169 = vld [vmem:[%s1 + $0x28] sm:$0xff]
      %v170 = vld [vmem:[%s1 + $0x30] sm:$0xff]
      %v171 = vld [vmem:[%s1 + $0x38] sm:$0xff]
      %v172 = vld [vmem:[%s1 + $0x40] sm:$0xff]
      %v173 = vld [vmem:[%s1 + $0x48] sm:$0xff]
      %v174 = vld [vmem:[%s1 + $0x50] sm:$0xff]
      %v175 = vld [vmem:[%s1 + $0x58] sm:$0xff]
      %v176 = vld [vmem:[%s1 + $0x60] sm:$0xff]
      %v177 = vld [vmem:[%s1 + $0x68] sm:$0xff]
      %v178 = vld [vmem:[%s1 + $0x70] sm:$0xff]
      %v179 = vld [vmem:[%s1 + $0x78] sm:$0xff]
      %v180 = vld [vmem:[%s1 + $0x80] sm:$0xff]
      %v181 = vld [vmem:[%s1 + $0x88] sm:$0xff]
      %v182 = vld [vmem:[%s155] sm:$0xff]
      %v183 = vld [vmem:[%s155 + $0x8] sm:$0xff]
      %v186 = vcombine.high %v182, %v182
      %v187 = vcombine.high %v183, %v183
      %vm188 = vcmask 31744
      %v190 = vsel %vm188, %v164, 0
      %v193 = vsel %vm188, %v165, 0
      %v196 = vsel %vm188, %v166, 0
      %v199 = vsel %vm188, %v167, 0
      %v202 = vsel %vm188, %v168, 0
      %v205 = vsel %vm188, %v169, 0
      %v208 = vsel %vm188, %v170, 0
      %v211 = vsel %vm188, %v171, 0
      %v214 = vsel %vm188, %v172, 0
      %v217 = vsel %vm188, %v173, 0
      %v220 = vsel %vm188, %v174, 0
      %v223 = vsel %vm188, %v175, 0
      %v226 = vsel %vm188, %v176, 0
      %v229 = vsel %vm188, %v177, 0
      %v232 = vsel %vm188, %v178, 0
      %v235 = vsel %vm188, %v179, 0
      %v238 = vsel %vm188, %v180, 0
      %v241 = vsel %vm188, %v181, 0
      %vm243 = vcmask 1043456
      %v244 = vsel %vm243, %v182, 0
      %v246 = vsel %vm243, %v186, 0
      %v248 = vsel %vm243, %v183, 0
      %v250 = vsel %vm243, %v187, 0
      %252 = vmatprep.subr.mxu0 0.0
      %253 = vmatpush1.msra.mxu0 0.0
      %254 = vmatprep.subr.mxu0 0.0
      %255 = vmatpush1.msra.mxu0 0.0
      %256 = vmatprep.subr.mxu0 0.0
      %257 = vmatpush1.msra.mxu0 0.0
      %258 = vmatprep.subr.mxu0 0.0
      %259 = vmatpush1.msra.mxu0 0.0
      %260 = vmatprep.subr.mxu0 0.0
      %261 = vmatpush1.msra.mxu0 0.0
      %262 = vmatprep.subr.mxu0 0.0
      %263 = vmatpush1.msra.mxu0 0.0
      %264 = vmatprep.subr.mxu0 0.0
      %265 = vmatpush1.msra.mxu0 0.0
      %266 = vmatprep.subr.mxu0 0.0
      %267 = vmatpush1.msra.mxu0 0.0
      %268 = vmatprep.subr.mxu0 0.0
      %269 = vmatpush1.msra.mxu0 0.0
      %270 = vmatprep.subr.mxu0 0.0
      %271 = vmatpush1.msra.mxu0 0.0
      %272 = vmatprep.subr.mxu0 0.0
      %273 = vmatpush1.msra.mxu0 0.0
      %274 = vmatprep.subr.mxu0 0.0
      %275 = vmatpush1.msra.mxu0 0.0
      %276 = vmatprep.subr.mxu0 0.0
      %277 = vmatpush1.msra.mxu0 0.0
      %278 = vmatprep.subr.mxu0 0.0
      %279 = vmatpush1.msra.mxu0 0.0
      %280 = vmatprep.subr.mxu0 0.0
      %281 = vmatpush1.msra.mxu0 0.0
      %282 = vmatprep.subr.mxu0 %v246
      %283 = vmatpush1.msra.mxu0 %v244
      %284 = vmatprep.subr.mxu0 0.0
      %285 = vmatpush2.msra.mxu0 0.0
      %286 = vmatprep.subr.mxu0 0.0
      %287 = vmatpush2.msra.mxu0 0.0
      %288 = vmatprep.subr.mxu0 0.0
      %289 = vmatpush2.msra.mxu0 0.0
      %290 = vmatprep.subr.mxu0 0.0
      %291 = vmatpush2.msra.mxu0 0.0
      %292 = vmatprep.subr.mxu0 0.0
      %293 = vmatpush2.msra.mxu0 0.0
      %294 = vmatprep.subr.mxu0 0.0
      %295 = vmatpush2.msra.mxu0 0.0
      %296 = vmatprep.subr.mxu0 0.0
      %297 = vmatpush2.msra.mxu0 0.0
      %298 = vmatprep.subr.mxu0 0.0
      %299 = vmatpush2.msra.mxu0 0.0
      %300 = vmatprep.subr.mxu0 0.0
      %301 = vmatpush2.msra.mxu0 0.0
      %302 = vmatprep.subr.mxu0 0.0
      %303 = vmatpush2.msra.mxu0 0.0
      %304 = vmatprep.subr.mxu0 0.0
      %305 = vmatpush2.msra.mxu0 0.0
      %306 = vmatprep.subr.mxu0 0.0
      %307 = vmatpush2.msra.mxu0 0.0
      %308 = vmatprep.subr.mxu0 0.0
      %309 = vmatpush2.msra.mxu0 0.0
      %310 = vmatprep.subr.mxu0 0.0
      %311 = vmatpush2.msra.mxu0 0.0
      %312 = vmatprep.subr.mxu0 0.0
      %313 = vmatpush2.msra.mxu0 0.0
      %314 = vmatprep.subr.mxu0 0.0
      %315 = vmatpush2.msra.mxu0 0.0
      %316 = vmatprep.mubr.f32.mxu0 0.0
      %317 = vmatmul.mubr.f32.gmra.mxu0 %v190
      %v318 = vpop.f32.mrf.mxu0
      %v319 = vadd.f32 0.0, %v318
      %v320 = vpop.f32.mrf.mxu0
      %v321 = vadd.f32 0.0, %v320
      %322 = vmatprep.mubr.f32.mxu0 0.0
      %323 = vmatmul.mubr.f32.gmra.mxu0 %v193
      %v324 = vpop.f32.mrf.mxu0
      %v325 = vadd.f32 0.0, %v324
      %v326 = vpop.f32.mrf.mxu0
      %v327 = vadd.f32 0.0, %v326
      %328 = vmatprep.mubr.f32.mxu0 0.0
      %329 = vmatmul.mubr.f32.gmra.mxu0 %v196
      %v330 = vpop.f32.mrf.mxu0
      %v331 = vadd.f32 0.0, %v330
      %v332 = vpop.f32.mrf.mxu0
      %v333 = vadd.f32 0.0, %v332
      %334 = vmatprep.mubr.f32.mxu0 0.0
      %335 = vmatmul.mubr.f32.gmra.mxu0 %v199
      %v336 = vpop.f32.mrf.mxu0
      %v337 = vadd.f32 0.0, %v336
      %v338 = vpop.f32.mrf.mxu0
      %v339 = vadd.f32 0.0, %v338
      %340 = vmatprep.mubr.f32.mxu0 0.0
      %341 = vmatmul.mubr.f32.gmra.mxu0 %v202
      %v342 = vpop.f32.mrf.mxu0
      %v343 = vadd.f32 0.0, %v342
      %v344 = vpop.f32.mrf.mxu0
      %v345 = vadd.f32 0.0, %v344
      %346 = vmatprep.mubr.f32.mxu0 0.0
      %347 = vmatmul.mubr.f32.gmra.mxu0 %v205
      %v348 = vpop.f32.mrf.mxu0
      %v349 = vadd.f32 0.0, %v348
      %v350 = vpop.f32.mrf.mxu0
      %v351 = vadd.f32 0.0, %v350
      %352 = vmatprep.mubr.f32.mxu0 0.0
      %353 = vmatmul.mubr.f32.gmra.mxu0 %v208
      %v354 = vpop.f32.mrf.mxu0
      %v355 = vadd.f32 0.0, %v354
      %v356 = vpop.f32.mrf.mxu0
      %v357 = vadd.f32 0.0, %v356
      %358 = vmatprep.mubr.f32.mxu0 0.0
      %359 = vmatmul.mubr.f32.gmra.mxu0 %v211
      %v360 = vpop.f32.mrf.mxu0
      %v361 = vadd.f32 0.0, %v360
      %v362 = vpop.f32.mrf.mxu0
      %v363 = vadd.f32 0.0, %v362
      %364 = vmatprep.mubr.f32.mxu0 0.0
      %365 = vmatmul.mubr.f32.gmra.mxu0 %v214
      %v366 = vpop.f32.mrf.mxu0
      %v367 = vadd.f32 0.0, %v366
      %v368 = vpop.f32.mrf.mxu0
      %v369 = vadd.f32 0.0, %v368
      %370 = vmatprep.mubr.f32.mxu0 0.0
      %371 = vmatmul.mubr.f32.gmra.mxu0 %v217
      %v372 = vpop.f32.mrf.mxu0
      %v373 = vadd.f32 0.0, %v372
      %v374 = vpop.f32.mrf.mxu0
      %v375 = vadd.f32 0.0, %v374
      %376 = vmatprep.mubr.f32.mxu0 0.0
      %377 = vmatmul.mubr.f32.gmra.mxu0 %v220
      %v378 = vpop.f32.mrf.mxu0
      %v379 = vadd.f32 0.0, %v378
      %v380 = vpop.f32.mrf.mxu0
      %v381 = vadd.f32 0.0, %v380
      %382 = vmatprep.mubr.f32.mxu0 0.0
      %383 = vmatmul.mubr.f32.gmra.mxu0 %v223
      %v384 = vpop.f32.mrf.mxu0
      %v385 = vadd.f32 0.0, %v384
      %v386 = vpop.f32.mrf.mxu0
      %v387 = vadd.f32 0.0, %v386
      %388 = vmatprep.mubr.f32.mxu0 0.0
      %389 = vmatmul.mubr.f32.gmra.mxu0 %v226
      %v390 = vpop.f32.mrf.mxu0
      %v391 = vpop.f32.mrf.mxu0
      %v392 = vadd.f32 0.0, %v391
      %393 = vmatprep.mubr.f32.mxu0 0.0
      %394 = vmatmul.mubr.f32.gmra.mxu0 %v229
      %v395 = vpop.f32.mrf.mxu0
      %v396 = vpop.f32.mrf.mxu0
      %v397 = vadd.f32 0.0, %v396
      %398 = vmatprep.mubr.f32.mxu0 0.0
      %399 = vmatmul.mubr.f32.gmra.mxu0 %v232
      %v400 = vpop.f32.mrf.mxu0
      %v401 = vpop.f32.mrf.mxu0
      %v402 = vadd.f32 0.0, %v401
      %403 = vmatprep.mubr.f32.mxu0 0.0
      %404 = vmatmul.mubr.f32.gmra.mxu0 %v235
      %v405 = vpop.f32.mrf.mxu0
      %v406 = vpop.f32.mrf.mxu0
      %v407 = vadd.f32 0.0, %v406
      %408 = vmatprep.mubr.f32.mxu0 0.0
      %409 = vmatmul.mubr.f32.gmra.mxu0 %v238
      %v410 = vpop.f32.mrf.mxu0
      %v411 = vpop.f32.mrf.mxu0
      %v412 = vadd.f32 0.0, %v411
      %413 = vmatprep.mubr.f32.mxu0 0.0
      %414 = vmatmul.mubr.f32.gmra.mxu0 %v241
      %v415 = vpop.f32.mrf.mxu0
      %v416 = vpop.f32.mrf.mxu0
      %v417 = vadd.f32 0.0, %v416
      %418 = vdwg.mxu0
      %419 = vmatprep.subr.mxu0 0.0
      %420 = vmatpush1.msra.mxu0 0.0
      %421 = vmatprep.subr.mxu0 0.0
      %422 = vmatpush1.msra.mxu0 0.0
      %423 = vmatprep.subr.mxu0 0.0
      %424 = vmatpush1.msra.mxu0 0.0
      %425 = vmatprep.subr.mxu0 0.0
      %426 = vmatpush1.msra.mxu0 0.0
      %427 = vmatprep.subr.mxu0 0.0
      %428 = vmatpush1.msra.mxu0 0.0
      %429 = vmatprep.subr.mxu0 0.0
      %430 = vmatpush1.msra.mxu0 0.0
      %431 = vmatprep.subr.mxu0 0.0
      %432 = vmatpush1.msra.mxu0 0.0
      %433 = vmatprep.subr.mxu0 0.0
      %434 = vmatpush1.msra.mxu0 0.0
      %435 = vmatprep.subr.mxu0 0.0
      %436 = vmatpush1.msra.mxu0 0.0
      %437 = vmatprep.subr.mxu0 0.0
      %438 = vmatpush1.msra.mxu0 0.0
      %439 = vmatprep.subr.mxu0 0.0
      %440 = vmatpush1.msra.mxu0 0.0
      %441 = vmatprep.subr.mxu0 0.0
      %442 = vmatpush1.msra.mxu0 0.0
      %443 = vmatprep.subr.mxu0 0.0
      %444 = vmatpush1.msra.mxu0 0.0
      %445 = vmatprep.subr.mxu0 0.0
      %446 = vmatpush1.msra.mxu0 0.0
      %447 = vmatprep.subr.mxu0 0.0
      %448 = vmatpush1.msra.mxu0 0.0
      %449 = vmatprep.subr.mxu0 %v250
      %450 = vmatpush1.msra.mxu0 %v248
      %451 = vmatprep.subr.mxu0 0.0
      %452 = vmatpush2.msra.mxu0 0.0
      %453 = vmatprep.subr.mxu0 0.0
      %454 = vmatpush2.msra.mxu0 0.0
      %455 = vmatprep.subr.mxu0 0.0
      %456 = vmatpush2.msra.mxu0 0.0
      %457 = vmatprep.subr.mxu0 0.0
      %458 = vmatpush2.msra.mxu0 0.0
      %459 = vmatprep.subr.mxu0 0.0
      %460 = vmatpush2.msra.mxu0 0.0
      %461 = vmatprep.subr.mxu0 0.0
      %462 = vmatpush2.msra.mxu0 0.0
      %463 = vmatprep.subr.mxu0 0.0
      %464 = vmatpush2.msra.mxu0 0.0
      %465 = vmatprep.subr.mxu0 0.0
      %466 = vmatpush2.msra.mxu0 0.0
      %467 = vmatprep.subr.mxu0 0.0
      %468 = vmatpush2.msra.mxu0 0.0
      %469 = vmatprep.subr.mxu0 0.0
      %470 = vmatpush2.msra.mxu0 0.0
      %471 = vmatprep.subr.mxu0 0.0
      %472 = vmatpush2.msra.mxu0 0.0
      %473 = vmatprep.subr.mxu0 0.0
      %474 = vmatpush2.msra.mxu0 0.0
      %475 = vmatprep.subr.mxu0 0.0
      %476 = vmatpush2.msra.mxu0 0.0
      %477 = vmatprep.subr.mxu0 0.0
      %478 = vmatpush2.msra.mxu0 0.0
      %479 = vmatprep.subr.mxu0 0.0
      %480 = vmatpush2.msra.mxu0 0.0
      %481 = vmatprep.subr.mxu0 0.0
      %482 = vmatpush2.msra.mxu0 0.0
      %483 = vmatprep.mubr.f32.mxu0 0.0
      %484 = vmatmul.mubr.f32.gmra.mxu0 %v190
      %v485 = vpop.f32.mrf.mxu0
      %v486 = vadd.f32 0.0, %v485
      %v487 = vpop.f32.mrf.mxu0
      %488 = vmatprep.mubr.f32.mxu0 0.0
      %489 = vmatmul.mubr.f32.gmra.mxu0 %v193
      %v490 = vpop.f32.mrf.mxu0
      %v491 = vadd.f32 0.0, %v490
      %v492 = vpop.f32.mrf.mxu0
      %493 = vmatprep.mubr.f32.mxu0 0.0
      %494 = vmatmul.mubr.f32.gmra.mxu0 %v196
      %v495 = vpop.f32.mrf.mxu0
      %v496 = vadd.f32 0.0, %v495
      %v497 = vpop.f32.mrf.mxu0
      %498 = vmatprep.mubr.f32.mxu0 0.0
      %499 = vmatmul.mubr.f32.gmra.mxu0 %v199
      %v500 = vpop.f32.mrf.mxu0
      %v501 = vadd.f32 0.0, %v500
      %v502 = vpop.f32.mrf.mxu0
      %503 = vmatprep.mubr.f32.mxu0 0.0
      %504 = vmatmul.mubr.f32.gmra.mxu0 %v202
      %v505 = vpop.f32.mrf.mxu0
      %v506 = vadd.f32 0.0, %v505
      %v507 = vpop.f32.mrf.mxu0
      %508 = vmatprep.mubr.f32.mxu0 0.0
      %509 = vmatmul.mubr.f32.gmra.mxu0 %v205
      %v510 = vpop.f32.mrf.mxu0
      %v511 = vadd.f32 0.0, %v510
      %v512 = vpop.f32.mrf.mxu0
      %513 = vmatprep.mubr.f32.mxu0 0.0
      %514 = vmatmul.mubr.f32.gmra.mxu0 %v208
      %v515 = vpop.f32.mrf.mxu0
      %v516 = vadd.f32 0.0, %v515
      %v517 = vpop.f32.mrf.mxu0
      %v518 = vadd.f32 0.0, %v517
      %519 = vmatprep.mubr.f32.mxu0 0.0
      %520 = vmatmul.mubr.f32.gmra.mxu0 %v211
      %v521 = vpop.f32.mrf.mxu0
      %v522 = vadd.f32 0.0, %v521
      %v523 = vpop.f32.mrf.mxu0
      %v524 = vadd.f32 0.0, %v523
      %525 = vmatprep.mubr.f32.mxu0 0.0
      %526 = vmatmul.mubr.f32.gmra.mxu0 %v214
      %v527 = vpop.f32.mrf.mxu0
      %v528 = vadd.f32 0.0, %v527
      %v529 = vpop.f32.mrf.mxu0
      %v530 = vadd.f32 0.0, %v529
      %531 = vmatprep.mubr.f32.mxu0 0.0
      %532 = vmatmul.mubr.f32.gmra.mxu0 %v217
      %v533 = vpop.f32.mrf.mxu0
      %v534 = vadd.f32 0.0, %v533
      %v535 = vpop.f32.mrf.mxu0
      %v536 = vadd.f32 0.0, %v535
      %537 = vmatprep.mubr.f32.mxu0 0.0
      %538 = vmatmul.mubr.f32.gmra.mxu0 %v220
      %v539 = vpop.f32.mrf.mxu0
      %v540 = vadd.f32 0.0, %v539
      %v541 = vpop.f32.mrf.mxu0
      %v542 = vadd.f32 0.0, %v541
      %543 = vmatprep.mubr.f32.mxu0 0.0
      %544 = vmatmul.mubr.f32.gmra.mxu0 %v223
      %v545 = vpop.f32.mrf.mxu0
      %v546 = vadd.f32 0.0, %v545
      %v547 = vpop.f32.mrf.mxu0
      %v548 = vadd.f32 0.0, %v547
      %549 = vmatprep.mubr.f32.mxu0 0.0
      %550 = vmatmul.mubr.f32.gmra.mxu0 %v226
      %v551 = vpop.f32.mrf.mxu0
      %v552 = vadd.f32 0.0, %v551
      %v553 = vpop.f32.mrf.mxu0
      %v554 = vadd.f32 0.0, %v553
      %555 = vmatprep.mubr.f32.mxu0 0.0
      %556 = vmatmul.mubr.f32.gmra.mxu0 %v229
      %v557 = vpop.f32.mrf.mxu0
      %v558 = vadd.f32 0.0, %v557
      %v559 = vpop.f32.mrf.mxu0
      %v560 = vadd.f32 0.0, %v559
      %561 = vmatprep.mubr.f32.mxu0 0.0
      %562 = vmatmul.mubr.f32.gmra.mxu0 %v232
      %v563 = vpop.f32.mrf.mxu0
      %v564 = vadd.f32 0.0, %v563
      %v565 = vpop.f32.mrf.mxu0
      %v566 = vadd.f32 0.0, %v565
      %567 = vmatprep.mubr.f32.mxu0 0.0
      %568 = vmatmul.mubr.f32.gmra.mxu0 %v235
      %v569 = vpop.f32.mrf.mxu0
      %v570 = vadd.f32 0.0, %v569
      %v571 = vpop.f32.mrf.mxu0
      %v572 = vadd.f32 0.0, %v571
      %573 = vmatprep.mubr.f32.mxu0 0.0
      %574 = vmatmul.mubr.f32.gmra.mxu0 %v238
      %v575 = vpop.f32.mrf.mxu0
      %v576 = vadd.f32 0.0, %v575
      %v577 = vpop.f32.mrf.mxu0
      %v578 = vadd.f32 0.0, %v577
      %579 = vmatprep.mubr.f32.mxu0 0.0
      %580 = vmatmul.mubr.f32.gmra.mxu0 %v241
      %v581 = vpop.f32.mrf.mxu0
      %v582 = vadd.f32 0.0, %v581
      %v583 = vpop.f32.mrf.mxu0
      %v584 = vadd.f32 0.0, %v583
      %585 = vdwg.mxu0
      %v586 = vadd.f32 %v319, 0.0
      %v587 = vadd.f32 %v321, 0.0
      %v588 = vadd.f32 %v486, 0.0
      %v589 = vadd.f32 %v325, 0.0
      %v590 = vadd.f32 %v327, 0.0
      %v591 = vadd.f32 %v491, 0.0
      %598 = vrot.lane.b32.xlu0 %v331, 125
      %v599 = vpop.permute.xlu0 %598
      %600 = vrot.lane.b32.xlu0 %v333, 125
      %v601 = vpop.permute.xlu0 %600
      %602 = vrot.lane.b32.xlu0 %v496, 125
      %v603 = vpop.permute.xlu0 %602
      %604 = vrot.lane.b32.xlu0 %v337, 125
      %v605 = vpop.permute.xlu0 %604
      %606 = vrot.lane.b32.xlu0 %v339, 125
      %v607 = vpop.permute.xlu0 %606
      %608 = vrot.lane.b32.xlu0 %v501, 125
      %v609 = vpop.permute.xlu0 %608
      %vm610 = vcmask 1022976
      %v611 = vsel %vm610, %v599, %v601
      %v612 = vsel %vm610, %v601, %v603
      %v613 = vsel %vm610, %v605, %v607
      %v614 = vsel %vm610, %v607, %v609
      %v621 = vadd.f32 %v586, %v611
      %v622 = vadd.f32 %v587, %v612
      %v623 = vadd.f32 %v588, %v603
      %v624 = vadd.f32 %v589, %v613
      %v625 = vadd.f32 %v590, %v614
      %v626 = vadd.f32 %v591, %v609
      %633 = vrot.lane.b32.xlu0 %v343, 122
      %v634 = vpop.permute.xlu0 %633
      %635 = vrot.lane.b32.xlu0 %v345, 122
      %v636 = vpop.permute.xlu0 %635
      %637 = vrot.lane.b32.xlu0 %v506, 122
      %v638 = vpop.permute.xlu0 %637
      %639 = vrot.lane.b32.xlu0 %v349, 122
      %v640 = vpop.permute.xlu0 %639
      %641 = vrot.lane.b32.xlu0 %v351, 122
      %v642 = vpop.permute.xlu0 %641
      %643 = vrot.lane.b32.xlu0 %v511, 122
      %v644 = vpop.permute.xlu0 %643
      %vm645 = vcmask 998400
      %v646 = vsel %vm645, %v634, %v636
      %v647 = vsel %vm645, %v636, %v638
      %v648 = vsel %vm645, %v640, %v642
      %v649 = vsel %vm645, %v642, %v644
      %v656 = vadd.f32 %v621, %v646
      %v657 = vadd.f32 %v622, %v647
      %v658 = vadd.f32 %v623, %v638
      %v659 = vadd.f32 %v624, %v648
      %v660 = vadd.f32 %v625, %v649
      %v661 = vadd.f32 %v626, %v644
      %670 = vrot.lane.b32.xlu0 %v355, 62
      %v671 = vpop.permute.xlu0 %670
      %672 = vrot.lane.b32.xlu0 %v357, 62
      %v673 = vpop.permute.xlu0 %672
      %674 = vrot.lane.b32.xlu0 %v516, 62
      %v675 = vpop.permute.xlu0 %674
      %676 = vrot.lane.b32.xlu0 %v518, 62
      %v677 = vpop.permute.xlu0 %676
      %678 = vrot.lane.b32.xlu0 %v361, 62
      %v679 = vpop.permute.xlu0 %678
      %680 = vrot.lane.b32.xlu0 %v363, 62
      %v681 = vpop.permute.xlu0 %680
      %682 = vrot.lane.b32.xlu0 %v522, 62
      %v683 = vpop.permute.xlu0 %682
      %684 = vrot.lane.b32.xlu0 %v524, 62
      %v685 = vpop.permute.xlu0 %684
      %vm686 = vcmask 506880
      %v687 = vsel %vm686, %v671, %v673
      %v688 = vsel %vm686, %v673, %v675
      %v689 = vsel %vm686, %v675, %v677
      %v690 = vsel %vm686, %v679, %v681
      %v691 = vsel %vm686, %v681, %v683
      %v692 = vsel %vm686, %v683, %v685
      %v699 = vadd.f32 %v656, %v687
      %v700 = vadd.f32 %v657, %v688
      %v701 = vadd.f32 %v658, %v689
      %v702 = vadd.f32 %v659, %v690
      %v703 = vadd.f32 %v660, %v691
      %v704 = vadd.f32 %v661, %v692
      %713 = vrot.lane.b32.xlu0 %v367, 59
      %v714 = vpop.permute.xlu0 %713
      %715 = vrot.lane.b32.xlu0 %v369, 59
      %v716 = vpop.permute.xlu0 %715
      %717 = vrot.lane.b32.xlu0 %v528, 59
      %v718 = vpop.permute.xlu0 %717
      %719 = vrot.lane.b32.xlu0 %v530, 59
      %v720 = vpop.permute.xlu0 %719
      %721 = vrot.lane.b32.xlu0 %v373, 59
      %v722 = vpop.permute.xlu0 %721
      %723 = vrot.lane.b32.xlu0 %v375, 59
      %v724 = vpop.permute.xlu0 %723
      %725 = vrot.lane.b32.xlu0 %v534, 59
      %v726 = vpop.permute.xlu0 %725
      %727 = vrot.lane.b32.xlu0 %v536, 59
      %v728 = vpop.permute.xlu0 %727
      %vm729 = vcmask 482304
      %v730 = vsel %vm729, %v714, %v716
      %v731 = vsel %vm729, %v716, %v718
      %v732 = vsel %vm729, %v718, %v720
      %v733 = vsel %vm729, %v722, %v724
      %v734 = vsel %vm729, %v724, %v726
      %v735 = vsel %vm729, %v726, %v728
      %v742 = vadd.f32 %v699, %v730
      %v743 = vadd.f32 %v700, %v731
      %v744 = vadd.f32 %v701, %v732
      %v745 = vadd.f32 %v702, %v733
      %v746 = vadd.f32 %v703, %v734
      %v747 = vadd.f32 %v704, %v735
      %756 = vrot.lane.b32.xlu0 %v379, 56
      %v757 = vpop.permute.xlu0 %756
      %758 = vrot.lane.b32.xlu0 %v381, 56
      %v759 = vpop.permute.xlu0 %758
      %760 = vrot.lane.b32.xlu0 %v540, 56
      %v761 = vpop.permute.xlu0 %760
      %762 = vrot.lane.b32.xlu0 %v542, 56
      %v763 = vpop.permute.xlu0 %762
      %764 = vrot.lane.b32.xlu0 %v385, 56
      %v765 = vpop.permute.xlu0 %764
      %766 = vrot.lane.b32.xlu0 %v387, 56
      %v767 = vpop.permute.xlu0 %766
      %768 = vrot.lane.b32.xlu0 %v546, 56
      %v769 = vpop.permute.xlu0 %768
      %770 = vrot.lane.b32.xlu0 %v548, 56
      %v771 = vpop.permute.xlu0 %770
      %vm772 = vcmask 457728
      %v773 = vsel %vm772, %v757, %v759
      %v774 = vsel %vm772, %v759, %v761
      %v775 = vsel %vm772, %v761, %v763
      %v776 = vsel %vm772, %v765, %v767
      %v777 = vsel %vm772, %v767, %v769
      %v778 = vsel %vm772, %v769, %v771
      %v785 = vadd.f32 %v742, %v773
      %v786 = vadd.f32 %v743, %v774
      %v787 = vadd.f32 %v744, %v775
      %v788 = vadd.f32 %v745, %v776
      %v789 = vadd.f32 %v746, %v777
      %v790 = vadd.f32 %v747, %v778
      %797 = vrot.lane.b32.xlu0 %v392, 124
      %v798 = vpop.permute.xlu0 %797
      %799 = vrot.lane.b32.xlu0 %v552, 124
      %v800 = vpop.permute.xlu0 %799
      %801 = vrot.lane.b32.xlu0 %v554, 124
      %v802 = vpop.permute.xlu0 %801
      %803 = vrot.lane.b32.xlu0 %v397, 124
      %v804 = vpop.permute.xlu0 %803
      %805 = vrot.lane.b32.xlu0 %v558, 124
      %v806 = vpop.permute.xlu0 %805
      %807 = vrot.lane.b32.xlu0 %v560, 124
      %v808 = vpop.permute.xlu0 %807
      %vm809 = vcmask 1014784
      %v810 = vsel %vm809, %v798, %v800
      %v811 = vsel %vm809, %v800, %v802
      %v812 = vsel %vm809, %v804, %v806
      %v813 = vsel %vm809, %v806, %v808
      %v820 = vadd.f32 %v785, %v810
      %v821 = vadd.f32 %v786, %v811
      %v822 = vadd.f32 %v787, %v802
      %v823 = vadd.f32 %v788, %v812
      %v824 = vadd.f32 %v789, %v813
      %v825 = vadd.f32 %v790, %v808
      %832 = vrot.lane.b32.xlu0 %v402, 121
      %v833 = vpop.permute.xlu0 %832
      %834 = vrot.lane.b32.xlu0 %v564, 121
      %v835 = vpop.permute.xlu0 %834
      %836 = vrot.lane.b32.xlu0 %v566, 121
      %v837 = vpop.permute.xlu0 %836
      %838 = vrot.lane.b32.xlu0 %v407, 121
      %v839 = vpop.permute.xlu0 %838
      %840 = vrot.lane.b32.xlu0 %v570, 121
      %v841 = vpop.permute.xlu0 %840
      %842 = vrot.lane.b32.xlu0 %v572, 121
      %v843 = vpop.permute.xlu0 %842
      %vm844 = vcmask 990208
      %v845 = vsel %vm844, %v833, %v835
      %v846 = vsel %vm844, %v835, %v837
      %v847 = vsel %vm844, %v839, %v841
      %v848 = vsel %vm844, %v841, %v843
      %v855 = vadd.f32 %v820, %v845
      %v856 = vadd.f32 %v821, %v846
      %v857 = vadd.f32 %v822, %v837
      %v858 = vadd.f32 %v823, %v847
      %v859 = vadd.f32 %v824, %v848
      %v860 = vadd.f32 %v825, %v843
      %867 = vrot.lane.b32.xlu0 %v412, 118
      %v868 = vpop.permute.xlu0 %867
      %869 = vrot.lane.b32.xlu0 %v576, 118
      %v870 = vpop.permute.xlu0 %869
      %871 = vrot.lane.b32.xlu0 %v578, 118
      %v872 = vpop.permute.xlu0 %871
      %873 = vrot.lane.b32.xlu0 %v417, 118
      %v874 = vpop.permute.xlu0 %873
      %875 = vrot.lane.b32.xlu0 %v582, 118
      %v876 = vpop.permute.xlu0 %875
      %877 = vrot.lane.b32.xlu0 %v584, 118
      %v878 = vpop.permute.xlu0 %877
      %vm879 = vcmask 965632
      %v880 = vsel %vm879, %v868, %v870
      %v881 = vsel %vm879, %v870, %v872
      %v882 = vsel %vm879, %v874, %v876
      %v883 = vsel %vm879, %v876, %v878
      %v890 = vadd.f32 %v855, %v880
      %v891 = vadd.f32 %v856, %v881
      %v892 = vadd.f32 %v857, %v872
      %v893 = vadd.f32 %v858, %v882
      %v894 = vadd.f32 %v859, %v883
      %v895 = vadd.f32 %v860, %v878
      %v896 = vld [vmem:[%s2] sm:$0x7]
      %v898 = vlaneseq
      %v899 = vshrl.u32 %v898, 7
      %v900 = vsub.s32 0, %v899
      %v901 = vrot.slane %v896, %v900
      %v902 = vlaneseq
      %v903 = vshrl.u32 %v902, 7
      %v904 = vsub.s32 1, %v903
      %v905 = vrot.slane %v896, %v904
      %v906 = vlaneseq
      %v907 = vshrl.u32 %v906, 7
      %v908 = vsub.s32 2, %v907
      %v909 = vrot.slane %v896, %v908
      %v913 = vmul.f32 %v890, %v901
      %v914 = vmul.f32 %v891, %v905
      %v915 = vmul.f32 %v892, %v909
      %v916 = vmul.f32 %v893, %v901
      %v917 = vmul.f32 %v894, %v905
      %v918 = vmul.f32 %v895, %v909
      %v919 = vadd.f32 %v913, %v914
      %vm920 = vcmask 785408
      %v921 = vsel %vm920, %v915, 0.0
      %v922 = vadd.f32 %v919, %v921
      %923 = vadd.xlane.f32.xlu0 %v922
      %v924 = vpop.xlane.xlu0 %923
      %vm925 = vcmask 1040384
      %v926 = vsel %vm925, %v916, 0.0
      %v927 = vsel %vm925, %v917, 0.0
      %v928 = vadd.f32 %v926, %v927
      %vm929 = vcmask 778240
      %v930 = vsel %vm929, %v918, 0.0
      %v931 = vadd.f32 %v928, %v930
      %932 = vadd.xlane.f32.xlu0 %v931
      %v933 = vpop.xlane.xlu0 %932
      %v934 = vmul.f32 %v924, 0.00390625
      %v935 = vmul.f32 %v933, 0.00390625
      %v936 = vsub.f32 %v890, %v934
      %v937 = vsub.f32 %v891, %v934
      %v938 = vsub.f32 %v892, %v934
      %v939 = vsub.f32 %v893, %v935
      %v940 = vsub.f32 %v894, %v935
      %v941 = vsub.f32 %v895, %v935
      %v942 = vmul.f32 %v936, %v901
      %v943 = vmul.f32 %v937, %v905
      %v944 = vmul.f32 %v938, %v909
      %v945 = vmul.f32 %v939, %v901
      %v946 = vmul.f32 %v940, %v905
      %v947 = vmul.f32 %v941, %v909
      %v948 = vmul.f32 %v942, %v942
      %v949 = vmul.f32 %v943, %v943
      %v950 = vmul.f32 %v944, %v944
      %v951 = vmul.f32 %v945, %v945
      %v952 = vmul.f32 %v946, %v946
      %v953 = vmul.f32 %v947, %v947
      %v954 = vadd.f32 %v948, %v949
      %v955 = vsel %vm920, %v950, 0.0
      %v956 = vadd.f32 %v954, %v955
      %957 = vadd.xlane.f32.xlu0 %v956
      %v958 = vpop.xlane.xlu0 %957
      %v959 = vsel %vm925, %v951, 0.0
      %v960 = vsel %vm925, %v952, 0.0
      %v961 = vadd.f32 %v959, %v960
      %v962 = vsel %vm929, %v953, 0.0
      %v963 = vadd.f32 %v961, %v962
      %964 = vadd.xlane.f32.xlu0 %v963
      %v965 = vpop.xlane.xlu0 %964
      %v966 = vld [vmem:[%s3] sm:$0xff]
      %v967 = vld [vmem:[%s3 + $0x8] sm:$0x1]
      %s968 = scvt.s32.f32 %s14
      %v969 = vsub.f32 %v934, %v966
      %v970 = vsub.f32 %v935, %v967
      %s971 = sadd.f32 %s968, 1.0
      %v972 = vstv %s971
      %v973 = vrcp.pop %v972
      %s974 = vtos %v973
      %v975 = vstv %s974
      %v976 = vmul.f32 %v969, %v975
      %v977 = vmul.f32 %v970, %v975
      %v978 = vadd.f32 %v966, %v976
      %v979 = vadd.f32 %v967, %v977
      %vm980 = vcmask 7168
      %981 = vst.msk [vmem:[%s3] sm:$0xff] %vm980, %v978
      %vm982 = vcmask 0
      %983 = vst.msk [vmem:[%s3 + $0x8] sm:$0x1] %vm982, %v979
      %v984 = vadd.f32 %v966, %v958
      %v985 = vadd.f32 %v967, %v965
      %v986 = vmul.f32 %v969, %v969
      %v987 = vmul.f32 %v970, %v970
      %s988 = smul.f32 %s968, 256.0
      %v989 = vstv %s971
      %v990 = vrcp.pop %v989
      %s991 = vtos %v990
      %s992 = smul.f32 %s988, %s991
      %v993 = vstv %s992
      %v994 = vmul.f32 %v986, %v993
      %v995 = vmul.f32 %v987, %v993
      %998 = vrot.lane.b32.xlu0 %v994, 1
      %v999 = vpop.permute.xlu0 %998
      %1000 = vrot.lane.b32.xlu0 %v995, 1
      %v1001 = vpop.permute.xlu0 %1000
      %v1004 = vadd.f32 %v984, %v999
      %v1005 = vadd.f32 %v985, %v1001
      %vm1006 = vcmask 15368
      %1007 = vst.msk [vmem:[%s3] sm:$0xff] %vm1006, %v1004
      %vm1008 = vcmask 8200
      %1009 = vst.msk [vmem:[%s3 + $0x8] sm:$0x1] %vm1008, %v1005
      %p1010 = scmp.eq.s32.totalorder %s14, 1
      // Predicated region
      $region37: #{tpu_custom_call.1} parent=31 // pred_check
        %p1011 = pneg %p1010
      $region38: #{tpu_custom_call.1} parent=31 // pred_check_branch
        %1013 = sbr.rel (%p1011) target = $region40
      $region39: #{tpu_custom_call.1} parent=31 // pred_region
        %v1014 = vld [vmem:[%s3] sm:$0xff]
        %v1015 = vld [vmem:[%s3 + $0x8] sm:$0x1]
        %v1016 = vmul.f32 %v1014, 0.001953125
        %v1017 = vmul.f32 %v1015, 0.001953125
        %v1018 = vadd.f32 %v1016, 1e-05
        %v1019 = vadd.f32 %v1017, 1e-05
        %v1020 = vrsqrt.pop %v1018
        %v1021 = vrsqrt.pop %v1019
        %1022 = vst.msk [vmem:[%s3] sm:$0xff] %vm1006, %v1020
        %1023 = vst.msk [vmem:[%s3 + $0x8] sm:$0x1] %vm1008, %v1021
      $region40: #{tpu_custom_call.1} parent=31 // pred_fallthru
        _
      // Predicated region
      $region41: #{tpu_custom_call.1} parent=31 // pred_check
        %p1024 = pneg %p95
      $region42: #{tpu_custom_call.1} parent=31 // pred_check_branch
        %1026 = sbr.rel (%p1024) target = $region44
      $region43: #{tpu_custom_call.1} parent=31 // pred_region
        _
      $region44: #{tpu_custom_call.1} parent=31 // pred_fallthru
        _
      // Predicated region
      $region45: #{tpu_custom_call.1} parent=31 // pred_check
        %p1027 = pneg %p95
      $region46: #{tpu_custom_call.1} parent=31 // pred_check_branch
        %1029 = sbr.rel (%p1027) target = $region48
      $region47: #{tpu_custom_call.1} parent=31 // pred_region
        _
      $region48: #{tpu_custom_call.1} parent=31 // pred_fallthru
        _
    $region32: #{tpu_custom_call.1} parent=5 // pred_fallthru
      _
    %p1030 = scmp.le.s32.totalorder 2, %s9
    // Predicated region
    $region49: #{tpu_custom_call.1} parent=5 // pred_check
      %p1031 = pneg %p1030
    $region50: #{tpu_custom_call.1} parent=5 // pred_check_branch
      %1033 = sbr.rel (%p1031) target = $region52
    $region51: #{tpu_custom_call.1} parent=5 // pred_region
      %s1034 = ssub.s32 %s9, 2
    $region52: #{tpu_custom_call.1} parent=5 // pred_fallthru
      _
  $region6: #{tpu_custom_call.1} parent=0 // loop_footer
    %s13 = sadd.s32 1, %s9
  $region7: #{tpu_custom_call.1} parent=0 // loop_footer_branch
    %8 = sbr.rel target = $region3
  $region8: #{tpu_custom_call.1} parent=0 // loop_exit
    _

</llo_original>
